<compile_context>
chip_gen: v7x
topology: tpu7x:2x2x1
jax: 0.10.0
libtpu: 0.0.40
codegen_flags: <defaults>
</compile_context>

<pallas_src>
import jax
import jax.numpy as jnp
import numpy as np
from jax.experimental import pallas as pl
from jax.experimental.pallas import tpu as pltpu


# ----------------------------- Pallas kernels ------------------------------

def _avgpool_cat_kernel(t00_ref, t01_ref, t10_ref, t11_ref, o_ref):
    # 2x2 average pool: taps were de-interleaved in the wrapper (layout only),
    # so this is a pure VPU average ...
    ap = 0.25 * (t00_ref[...] + t01_ref[...] + t10_ref[...] + t11_ref[...])
    k = ap.shape[-1]
    # ... and the channel concat is two lane-dense stores of the same tile.
    o_ref[:, :, :k] = ap
    o_ref[:, :, k:] = ap


def _copy_kernel(x_ref, o_ref):
    o_ref[...] = x_ref[...]


# ------------------------------ block picking ------------------------------

def _pick_batch_block(n):
    # Prefer >=2 grid steps along the 'parallel' batch axis (v7x: 2 TCs),
    # with the fewest (fattest) steps that divide n.
    for steps in range(2, min(n, 8) + 1):
        if n % steps == 0:
            return n // steps
    return n


def _pick_row_block(rows):
    # Sublane-aligned row block giving >=2 grid steps when possible.
    for bm in (512, 256, 128, 64, 32, 16, 8):
        if rows % bm == 0 and rows // bm >= 2:
            return bm
    return rows


# ------------------------------ wrappers ------------------------------------

def _identity_copy(x):
    # Identity branch of the module. (In a fused network this would be a
    # no-op; a lane-dense copy kernel is provided so both module branches run
    # through Pallas.)
    shape = x.shape
    total = int(np.prod(shape))
    cols = 128 if total % 128 == 0 else shape[-1]
    rows = total // cols
    flat = x.reshape(rows, cols)
    bm = _pick_row_block(rows)
    out = pl.pallas_call(
        _copy_kernel,
        out_shape=jax.ShapeDtypeStruct((rows, cols), x.dtype),
        grid_spec=pltpu.PrefetchScalarGridSpec(
            num_scalar_prefetch=0,
            grid=(rows // bm,),
            in_specs=[pl.BlockSpec((bm, cols), lambda i: (i, 0))],
            out_specs=pl.BlockSpec((bm, cols), lambda i: (i, 0)),
        ),
        compiler_params=pltpu.CompilerParams(
            dimension_semantics=("parallel",)),
    )(flat)
    return out.reshape(shape)


def shortcut(x_nchw, *, downsample):
    """Forward of the PyTorch Shortcut module. x_nchw: (N, C, H, W)."""
    x = x_nchw
    if not downsample:
        return _identity_copy(x)

    N, C, H, W = x.shape
    Hh, Wh = H // 2, W // 2          # floor, matches avg_pool2d(k=2, s=2)
    K = Hh * Wh
    xe = x[:, :, :2 * Hh, :2 * Wh]   # drop ragged row/col if H or W is odd

    # De-interleave the 2x2 pooling taps (strided slices = layout plumbing,
    # no duplication: the four taps together are exactly the bytes of x).
    t00 = xe[:, :, 0::2, 0::2].reshape(N, C, K)
    t01 = xe[:, :, 0::2, 1::2].reshape(N, C, K)
    t10 = xe[:, :, 1::2, 0::2].reshape(N, C, K)
    t11 = xe[:, :, 1::2, 1::2].reshape(N, C, K)

    bn = _pick_batch_block(N)        # >=2 parallel grid steps when N >= 2

    tap_spec = pl.BlockSpec((bn, C, K), lambda n: (n, 0, 0))
    out = pl.pallas_call(
        _avgpool_cat_kernel,
        out_shape=jax.ShapeDtypeStruct((N, C, 2 * K), x.dtype),
        grid_spec=pltpu.PrefetchScalarGridSpec(
            num_scalar_prefetch=0,
            grid=(N // bn,),
            in_specs=[tap_spec, tap_spec, tap_spec, tap_spec],
            out_specs=pl.BlockSpec((bn, C, 2 * K), lambda n: (n, 0, 0)),
        ),
        compiler_params=pltpu.CompilerParams(
            dimension_semantics=("parallel",)),
    )(t00, t01, t10, t11)

    # Kernel layout (N, C, [dup, Hh, Wh]) -> NCHW concat order (N, 2C, Hh, Wh):
    # out[:, c, :K] == out[:, c, K:] == ap[:, c], so reordering (C, dup) ->
    # (dup, C) reproduces cat([ap, ap], dim=1).
    out = out.reshape(N, C, 2, Hh, Wh)
    out = jnp.transpose(out, (0, 2, 1, 3, 4)).reshape(N, 2 * C, Hh, Wh)
    return out


# --------------------------- pure-JAX reference -----------------------------

def shortcut_reference(x, *, downsample):
    if not downsample:
        return x
    N, C, H, W = x.shape
    Hh, Wh = H // 2, W // 2
    ap = x[:, :, :2 * Hh, :2 * Wh].reshape(N, C, Hh, 2, Wh, 2).mean(axis=(3, 5))
    return jnp.concatenate([ap, ap], axis=1)


# --------------------------------- main -------------------------------------

if __name__ == "__main__":
    key = jax.random.PRNGKey(0)
    N, C, H, W = 2, 4, 16, 16
    x = jax.random.normal(key, (N, C, H, W), jnp.float32)   # NCHW like PyTorch

    # Case 1: downsample shortcut (2x2 avg-pool + channel concat).
    out_ds = shortcut(x, downsample=True)
    ref_ds = shortcut_reference(x, downsample=True)

    # Case 2: identity shortcut.
    out_id = shortcut(x, downsample=False)
    ref_id = shortcut_reference(x, downsample=False)

    jax.block_until_ready((out_ds, out_id))

    assert out_ds.shape == (N, 2 * C, H // 2, W // 2), out_ds.shape
    assert out_id.shape == (N, C, H, W), out_id.shape
    np.testing.assert_allclose(np.asarray(out_ds), np.asarray(ref_ds),
                               rtol=1e-6, atol=1e-6)
    np.testing.assert_allclose(np.asarray(out_id), np.asarray(ref_id),
                               rtol=0, atol=0)

    print("KERNEL_OK")
</pallas_src>

<mosaic_0001>
module attributes {stable_mosaic.version = 11 : i64} {
  func.func @_avgpool_cat_kernel(%arg0: i32, %arg1: memref<1x4x64xf32, #tpu.memory_space<vmem>>, %arg2: memref<1x4x64xf32, #tpu.memory_space<vmem>>, %arg3: memref<1x4x64xf32, #tpu.memory_space<vmem>>, %arg4: memref<1x4x64xf32, #tpu.memory_space<vmem>>, %arg5: memref<1x4x128xf32, #tpu.memory_space<vmem>>) attributes {dimension_semantics = [#tpu.dimension_semantics<parallel>], iteration_bounds = array<i64: 2>, scalar_prefetch = 0 : i64, scratch_operands = 0 : i64, tpu.core_type = #tpu.core_type<tc>, window_params = [{transform_indices = @transform_0, window_bounds = array<i64: 1, 4, 64>}, {transform_indices = @transform_1, window_bounds = array<i64: 1, 4, 64>}, {transform_indices = @transform_2, window_bounds = array<i64: 1, 4, 64>}, {transform_indices = @transform_3, window_bounds = array<i64: 1, 4, 64>}, {transform_indices = @transform_4, window_bounds = array<i64: 1, 4, 128>}]} {
    %c0 = arith.constant 0 : index
    %c0_0 = arith.constant 0 : index
    %c0_1 = arith.constant 0 : index
    %0 = vector.load %arg1[%c0, %c0_0, %c0_1] : memref<1x4x64xf32, #tpu.memory_space<vmem>>, vector<1x4x64xf32>
    %c0_2 = arith.constant 0 : index
    %c0_3 = arith.constant 0 : index
    %c0_4 = arith.constant 0 : index
    %1 = vector.load %arg2[%c0_2, %c0_3, %c0_4] : memref<1x4x64xf32, #tpu.memory_space<vmem>>, vector<1x4x64xf32>
    %2 = arith.addf %0, %1 : vector<1x4x64xf32>
    %c0_5 = arith.constant 0 : index
    %c0_6 = arith.constant 0 : index
    %c0_7 = arith.constant 0 : index
    %3 = vector.load %arg3[%c0_5, %c0_6, %c0_7] : memref<1x4x64xf32, #tpu.memory_space<vmem>>, vector<1x4x64xf32>
    %4 = arith.addf %2, %3 : vector<1x4x64xf32>
    %c0_8 = arith.constant 0 : index
    %c0_9 = arith.constant 0 : index
    %c0_10 = arith.constant 0 : index
    %5 = vector.load %arg4[%c0_8, %c0_9, %c0_10] : memref<1x4x64xf32, #tpu.memory_space<vmem>>, vector<1x4x64xf32>
    %6 = arith.addf %4, %5 : vector<1x4x64xf32>
    %cst = arith.constant 2.500000e-01 : f32
    %7 = vector.broadcast %cst : f32 to vector<1x4x64xf32>
    %8 = arith.mulf %7, %6 : vector<1x4x64xf32>
    %c0_11 = arith.constant 0 : index
    %c0_12 = arith.constant 0 : index
    %c0_13 = arith.constant 0 : index
    %9 = vector.load %arg5[%c0_11, %c0_12, %c0_13] : memref<1x4x128xf32, #tpu.memory_space<vmem>>, vector<1x4x64xf32>
    tpu.vector_store %arg5[%c0_11, %c0_12, %c0_13], %8 {strides = array<i32>} : memref<1x4x128xf32, #tpu.memory_space<vmem>>, vector<1x4x64xf32>,
    %c0_14 = arith.constant 0 : index
    %c0_15 = arith.constant 0 : index
    %c64 = arith.constant 64 : index
    %10 = vector.load %arg5[%c0_14, %c0_15, %c64] : memref<1x4x128xf32, #tpu.memory_space<vmem>>, vector<1x4x64xf32>
    tpu.vector_store %arg5[%c0_14, %c0_15, %c64], %8 {strides = array<i32>} : memref<1x4x128xf32, #tpu.memory_space<vmem>>, vector<1x4x64xf32>,
    return
  }
  func.func @transform_0(%arg0: i32) -> (i32, i32, i32) {
    %c0_i32 = arith.constant 0 : i32
    %c0_i32_0 = arith.constant 0 : i32
    %c0_i32_1 = arith.constant 0 : i32
    return %arg0, %c0_i32, %c0_i32_0 : i32, i32, i32
  }
  func.func @transform_1(%arg0: i32) -> (i32, i32, i32) {
    %c0_i32 = arith.constant 0 : i32
    %c0_i32_0 = arith.constant 0 : i32
    %c0_i32_1 = arith.constant 0 : i32
    return %arg0, %c0_i32, %c0_i32_0 : i32, i32, i32
  }
  func.func @transform_2(%arg0: i32) -> (i32, i32, i32) {
    %c0_i32 = arith.constant 0 : i32
    %c0_i32_0 = arith.constant 0 : i32
    %c0_i32_1 = arith.constant 0 : i32
    return %arg0, %c0_i32, %c0_i32_0 : i32, i32, i32
  }
  func.func @transform_3(%arg0: i32) -> (i32, i32, i32) {
    %c0_i32 = arith.constant 0 : i32
    %c0_i32_0 = arith.constant 0 : i32
    %c0_i32_1 = arith.constant 0 : i32
    return %arg0, %c0_i32, %c0_i32_0 : i32, i32, i32
  }
  func.func @transform_4(%arg0: i32) -> (i32, i32, i32) {
    %c0_i32 = arith.constant 0 : i32
    %c0_i32_0 = arith.constant 0 : i32
    %c0_i32_1 = arith.constant 0 : i32
    return %arg0, %c0_i32, %c0_i32_0 : i32, i32, i32
  }
}

</mosaic_0001>

<llo_original>
// kernel: tpu_custom_call.1
$region0: #{tpu_custom_call.1}
  #allocation0 [shape = 'u32[]', space=smem, size = 0x4, offset = 0x4, fixed_abs, tag = 'smem constant byte address 0x4 - core index']
  #allocation1 [shape = 'u32[144,128]{1,0:T(1,128)}', space=vmem, size = 0x12000, scoped, tag = 'internal scratch']
  %s0 = inlined_call_operand.hbm [shape: f32[2,4,64], index: 0, kind: input, shape index: {}]
  %s1 = inlined_call_operand.hbm [shape: f32[2,4,64], index: 1, kind: input, shape index: {}]
  %s2 = inlined_call_operand.hbm [shape: f32[2,4,64], index: 2, kind: input, shape index: {}]
  %s3 = inlined_call_operand.vmem [shape: f32[2,4,64], index: 3, kind: input, shape index: {}]
  %s4 = inlined_call_operand.hbm [shape: f32[2,4,128], index: 4, kind: output, shape index: {}]
  %s5 = sld [smem:[#allocation0]]
  $region61: #{tpu_custom_call.1} parent=0
    _
  %s7 = ssub.s32 1, %s5
  %s8 = scalar_select 0, %s7, %s5
  $region1: #{tpu_custom_call.1} parent=0
    #allocation2 [shape = 'u8[4096]{0}', space=vmem, size = 0x1000, scoped, tag = 'input window, operand 0']
    #allocation3 [shape = 's32[2]{0}', space=sflag, size = 0x8, scoped, tag = 'scoped memory for tpu_custom_call.1']
    #allocation4 [shape = 's32[2]{0}', space=sflag, size = 0x8, scoped, tag = 'scoped memory for tpu_custom_call.1']
    #allocation5 [shape = 'u8[4096]{0}', space=vmem, size = 0x1000, scoped, tag = 'input window, operand 1']
    #allocation6 [shape = 's32[2]{0}', space=sflag, size = 0x8, scoped, tag = 'scoped memory for tpu_custom_call.1']
    #allocation7 [shape = 'u8[4096]{0}', space=vmem, size = 0x1000, scoped, tag = 'input window, operand 2']
    #allocation8 [shape = 'u8[4096]{0}', space=vmem, size = 0x1000, scoped, tag = 'output window, operand 0']
    %9 = vsyncpa [#allocation3], 0
    %s10 = scalar_lea.sflag [#allocation3], 1
    %11 = vsyncpa %s10, 0
    %12 = vsyncpa [#allocation6], 0
    %s13 = scalar_lea.sflag [#allocation6], 1
    %14 = vsyncpa %s13, 0
    %15 = vsyncpa [#allocation4], 0
    %s16 = scalar_lea.sflag [#allocation4], 1
    %17 = vsyncpa %s16, 0
    loop: start=0, step=1, limit=4
    $region2: #{tpu_custom_call.1} parent=1 // loop_pre_header
      _
    $region3: #{tpu_custom_call.1} parent=1 // loop_header
      %s19 = sphi 0, %s23
      %p20 = scmp.ge.s32.totalorder %s19, 4
      %s29 = sphi 0, %s31
      %s32 = sphi 0, %s29
      %s33 = sphi 0, %s32
      %s49 = sphi 0, %s33
      %s55 = sphi 0, %s57
      %s58 = sphi 0, %s55
      %s59 = sphi 0, %s58
      %s75 = sphi 0, %s59
      %s81 = sphi 0, %s83
      %s84 = sphi 0, %s81
      %s85 = sphi 0, %s84
      %s101 = sphi 0, %s85
      %s107 = sphi 0, %s109
      %s110 = sphi 0, %s107
      %s111 = sphi 0, %s110
      %s127 = sphi 0, %s111
      %s133 = sphi 0, %s135
      %s136 = sphi 0, %s133
      %s137 = sphi 0, %s136
      %s153 = sphi 0, %s137
    $region4: #{tpu_custom_call.1} parent=1 // loop_header_branch
      %22 = sbr.rel (%p20) target = $region8
    $region5: #{tpu_custom_call.1} parent=1 // loop_body
      %s24 = ssub.s32 %s19, 1
      %s25 = ssub.s32 %s19, 2
      %s26 = sadd.s32 %s19, 1
      %s27 = ssub.s32 %s19, %s26
      %p28 = scmp.eq.s32.totalorder %s27, 0
      %s30 = sadd.s32 %s29, 1
      %s31 = scalar_select %p28, %s29, %s30
      %p34 = pneg %p28
      %p35 = scmp.eq.s32.totalorder %s19, 1
      %p36 = por %p34, %p35
      %p37 = scmp.ne.s32.totalorder %s29, %s32
      %p38 = scmp.eq.s32.totalorder %s19, 0
      %p39 = por %p37, %p38
      %p40 = scmp.ne.s32.totalorder %s29, %s32
      %p41 = scmp.eq.s32.totalorder %s24, 1
      %p42 = por %p40, %p41
      %p43 = scmp.ne.s32.totalorder %s32, %s33
      %p44 = scmp.eq.s32.totalorder %s24, 0
      %p45 = por %p43, %p44
      %p46 = scmp.ne.s32.totalorder %s32, %s33
      %p47 = scmp.eq.s32.totalorder %s25, 1
      %p48 = por %p46, %p47
      %p50 = scmp.ne.s32.totalorder %s33, %s49
      %p51 = scmp.eq.s32.totalorder %s25, 0
      %p52 = por %p50, %p51
      %s53 = ssub.s32 %s19, %s26
      %p54 = scmp.eq.s32.totalorder %s53, 0
      %s56 = sadd.s32 %s55, 1
      %s57 = scalar_select %p54, %s55, %s56
      %p60 = pneg %p54
      %p61 = scmp.eq.s32.totalorder %s19, 1
      %p62 = por %p60, %p61
      %p63 = scmp.ne.s32.totalorder %s55, %s58
      %p64 = scmp.eq.s32.totalorder %s19, 0
      %p65 = por %p63, %p64
      %p66 = scmp.ne.s32.totalorder %s55, %s58
      %p67 = scmp.eq.s32.totalorder %s24, 1
      %p68 = por %p66, %p67
      %p69 = scmp.ne.s32.totalorder %s58, %s59
      %p70 = scmp.eq.s32.totalorder %s24, 0
      %p71 = por %p69, %p70
      %p72 = scmp.ne.s32.totalorder %s58, %s59
      %p73 = scmp.eq.s32.totalorder %s25, 1
      %p74 = por %p72, %p73
      %p76 = scmp.ne.s32.totalorder %s59, %s75
      %p77 = scmp.eq.s32.totalorder %s25, 0
      %p78 = por %p76, %p77
      %s79 = ssub.s32 %s19, %s26
      %p80 = scmp.eq.s32.totalorder %s79, 0
      %s82 = sadd.s32 %s81, 1
      %s83 = scalar_select %p80, %s81, %s82
      %p86 = pneg %p80
      %p87 = scmp.eq.s32.totalorder %s19, 1
      %p88 = por %p86, %p87
      %p89 = scmp.ne.s32.totalorder %s81, %s84
      %p90 = scmp.eq.s32.totalorder %s19, 0
      %p91 = por %p89, %p90
      %p92 = scmp.ne.s32.totalorder %s81, %s84
      %p93 = scmp.eq.s32.totalorder %s24, 1
      %p94 = por %p92, %p93
      %p95 = scmp.ne.s32.totalorder %s84, %s85
      %p96 = scmp.eq.s32.totalorder %s24, 0
      %p97 = por %p95, %p96
      %p98 = scmp.ne.s32.totalorder %s84, %s85
      %p99 = scmp.eq.s32.totalorder %s25, 1
      %p100 = por %p98, %p99
      %p102 = scmp.ne.s32.totalorder %s85, %s101
      %p103 = scmp.eq.s32.totalorder %s25, 0
      %p104 = por %p102, %p103
      %s105 = ssub.s32 %s19, %s26
      %p106 = scmp.eq.s32.totalorder %s105, 0
      %s108 = sadd.s32 %s107, 1
      %s109 = scalar_select %p106, %s107, %s108
      %p112 = pneg %p106
      %p113 = scmp.eq.s32.totalorder %s19, 1
      %p114 = por %p112, %p113
      %p115 = scmp.ne.s32.totalorder %s107, %s110
      %p116 = scmp.eq.s32.totalorder %s19, 0
      %p117 = por %p115, %p116
      %p118 = scmp.ne.s32.totalorder %s107, %s110
      %p119 = scmp.eq.s32.totalorder %s24, 1
      %p120 = por %p118, %p119
      %p121 = scmp.ne.s32.totalorder %s110, %s111
      %p122 = scmp.eq.s32.totalorder %s24, 0
      %p123 = por %p121, %p122
      %p124 = scmp.ne.s32.totalorder %s110, %s111
      %p125 = scmp.eq.s32.totalorder %s25, 1
      %p126 = por %p124, %p125
      %p128 = scmp.ne.s32.totalorder %s111, %s127
      %p129 = scmp.eq.s32.totalorder %s25, 0
      %p130 = por %p128, %p129
      %s131 = ssub.s32 %s19, %s26
      %p132 = scmp.eq.s32.totalorder %s131, 0
      %s134 = sadd.s32 %s133, 1
      %s135 = scalar_select %p132, %s133, %s134
      %p138 = pneg %p132
      %p139 = scmp.eq.s32.totalorder %s19, 1
      %p140 = por %p138, %p139
      %p141 = scmp.ne.s32.totalorder %s133, %s136
      %p142 = scmp.eq.s32.totalorder %s19, 0
      %p143 = por %p141, %p142
      %p144 = scmp.ne.s32.totalorder %s133, %s136
      %p145 = scmp.eq.s32.totalorder %s24, 1
      %p146 = por %p144, %p145
      %p147 = scmp.ne.s32.totalorder %s136, %s137
      %p148 = scmp.eq.s32.totalorder %s24, 0
      %p149 = por %p147, %p148
      %p150 = scmp.ne.s32.totalorder %s136, %s137
      %p151 = scmp.eq.s32.totalorder %s25, 1
      %p152 = por %p150, %p151
      %p154 = scmp.ne.s32.totalorder %s137, %s153
      %p155 = scmp.eq.s32.totalorder %s25, 0
      %p156 = por %p154, %p155
      %p157 = scmp.le.s32.totalorder 1, %s19
      %p158 = scmp.lt.s32.totalorder %s19, 3
      %p159 = pnand %p157, %p158
      %p160 = pneg %p159
      // Predicated region
      $region9: #{tpu_custom_call.1} parent=5 // pred_check
        _
      $region10: #{tpu_custom_call.1} parent=5 // pred_check_branch
        %162 = sbr.rel (%p159) target = $region12
      $region11: #{tpu_custom_call.1} parent=5 // pred_region
        %s163 = ssub.s32 %s19, 1
      $region12: #{tpu_custom_call.1} parent=5 // pred_fallthru
        _
      %p164 = scmp.lt.s32.totalorder %s19, 2
      // Predicated region
      $region13: #{tpu_custom_call.1} parent=5 // pred_check
        %p165 = pneg %p164
      $region14: #{tpu_custom_call.1} parent=5 // pred_check_branch
        %167 = sbr.rel (%p165) target = $region16
      $region15: #{tpu_custom_call.1} parent=5 // pred_region
        // Predicated region
        $region17: #{tpu_custom_call.1} parent=15 // pred_check
          %p168 = pneg %p39
        $region18: #{tpu_custom_call.1} parent=15 // pred_check_branch
          %170 = sbr.rel (%p168) target = $region20
        $region19: #{tpu_custom_call.1} parent=15 // pred_region
          %s171 = sand.u32 %s29, 1
          %s172 = scalar_lea.sflag [#allocation3], %s171
          %s173 = sand.u32 %s29, 1
          %s174 = smul.addr %s173, 4
          %s175 = scalar_lea.vmem [#allocation2], %s174
          %s177 = ssub.s32 64, 64
          %178 = vsyncadd %s172, %s177
          %s179 = smul.addr %s19, 64
          %s180 = scalar_lea.hbm %s0, %s179
          %s182 = sshll.u32 %s175, 4
          %s183 = int_to_ptr.vmem [resolvable:$true] %s182
          %185 = dma.hbm_to_vmem [thread:$0]  %s180, 64, %s183, %s172
        $region20: #{tpu_custom_call.1} parent=15 // pred_fallthru
          _
        // Predicated region
        $region21: #{tpu_custom_call.1} parent=15 // pred_check
          %p186 = pneg %p65
        $region22: #{tpu_custom_call.1} parent=15 // pred_check_branch
          %188 = sbr.rel (%p186) target = $region24
        $region23: #{tpu_custom_call.1} parent=15 // pred_region
          %s189 = sand.u32 %s19, 1
          %s190 = scalar_lea.sflag [#allocation6], %s189
          %s191 = sand.u32 %s55, 1
          %s192 = smul.addr %s191, 4
          %s193 = scalar_lea.vmem [#allocation5], %s192
          %s195 = ssub.s32 64, 64
          %196 = vsyncadd %s190, %s195
          %s197 = smul.addr %s19, 64
          %s198 = scalar_lea.hbm %s1, %s197
          %s200 = sshll.u32 %s193, 4
          %s201 = int_to_ptr.vmem [resolvable:$true] %s200
          %203 = dma.hbm_to_vmem [thread:$0]  %s198, 64, %s201, %s190
        $region24: #{tpu_custom_call.1} parent=15 // pred_fallthru
          _
        // Predicated region
        $region25: #{tpu_custom_call.1} parent=15 // pred_check
          %p204 = pneg %p91
        $region26: #{tpu_custom_call.1} parent=15 // pred_check_branch
          %206 = sbr.rel (%p204) target = $region28
        $region27: #{tpu_custom_call.1} parent=15 // pred_region
          %s207 = sand.u32 %s19, 1
          %s208 = scalar_lea.sflag [#allocation6], %s207
          %s209 = sand.u32 %s81, 1
          %s210 = smul.addr %s209, 4
          %s211 = scalar_lea.vmem [#allocation7], %s210
          %s213 = ssub.s32 64, 64
          %214 = vsyncadd %s208, %s213
          %s215 = smul.addr %s19, 64
          %s216 = scalar_lea.hbm %s2, %s215
          %s218 = sshll.u32 %s211, 4
          %s219 = int_to_ptr.vmem [resolvable:$true] %s218
          %221 = dma.hbm_to_vmem [thread:$0]  %s216, 64, %s219, %s208
        $region28: #{tpu_custom_call.1} parent=15 // pred_fallthru
          _
        // Predicated region
        $region29: #{tpu_custom_call.1} parent=15 // pred_check
          %p222 = pneg %p117
        $region30: #{tpu_custom_call.1} parent=15 // pred_check_branch
          %224 = sbr.rel (%p222) target = $region32
        $region31: #{tpu_custom_call.1} parent=15 // pred_region
          %p225 = scmp.lt.s32.totalorder %s19, 1
          %s226 = scalar_select %p225, %s19, 1
          %s227 = smul.addr %s226, 4
          %s228 = scalar_lea.vmem %s3, %s227
        $region32: #{tpu_custom_call.1} parent=15 // pred_fallthru
          _
      $region16: #{tpu_custom_call.1} parent=5 // pred_fallthru
        _
      %p229 = scmp.le.s32.totalorder 1, %s19
      %p230 = scmp.lt.s32.totalorder %s19, 3
      %p231 = pnand %p229, %p230
      %p232 = pneg %p231
      // Predicated region
      $region33: #{tpu_custom_call.1} parent=5 // pred_check
        _
      $region34: #{tpu_custom_call.1} parent=5 // pred_check_branch
        %234 = sbr.rel (%p231) target = $region36
      $region35: #{tpu_custom_call.1} parent=5 // pred_region
        %s235 = ssub.s32 %s19, 1
        %s236 = sand.u32 %s32, 1
        %s237 = scalar_lea.sflag [#allocation3], %s236
        %s238 = sand.u32 %s32, 1
        %s239 = smul.addr %s238, 4
        %s240 = scalar_lea.vmem [#allocation2], %s239
        // Predicated region
        $region37: #{tpu_custom_call.1} parent=35 // pred_check
          %p241 = pneg %p45
        $region38: #{tpu_custom_call.1} parent=35 // pred_check_branch
          %243 = sbr.rel (%p241) target = $region40
        $region39: #{tpu_custom_call.1} parent=35 // pred_region
          %244 = dma.done %s237, 64
        $region40: #{tpu_custom_call.1} parent=35 // pred_fallthru
          _
        %s245 = sand.u32 %s24, 1
        %s246 = scalar_lea.sflag [#allocation6], %s245
        %s247 = sand.u32 %s58, 1
        %s248 = smul.addr %s247, 4
        %s249 = scalar_lea.vmem [#allocation5], %s248
        // Predicated region
        $region41: #{tpu_custom_call.1} parent=35 // pred_check
          %p250 = pneg %p71
        $region42: #{tpu_custom_call.1} parent=35 // pred_check_branch
          %252 = sbr.rel (%p250) target = $region44
        $region43: #{tpu_custom_call.1} parent=35 // pred_region
          %253 = dma.done %s246, 64
        $region44: #{tpu_custom_call.1} parent=35 // pred_fallthru
          _
        %s254 = sand.u32 %s24, 1
        %s255 = scalar_lea.sflag [#allocation6], %s254
        %s256 = sand.u32 %s84, 1
        %s257 = smul.addr %s256, 4
        %s258 = scalar_lea.vmem [#allocation7], %s257
        // Predicated region
        $region45: #{tpu_custom_call.1} parent=35 // pred_check
          %p259 = pneg %p97
        $region46: #{tpu_custom_call.1} parent=35 // pred_check_branch
          %261 = sbr.rel (%p259) target = $region48
        $region47: #{tpu_custom_call.1} parent=35 // pred_region
          %262 = dma.done %s255, 64
        $region48: #{tpu_custom_call.1} parent=35 // pred_fallthru
          _
        %s263 = sand.u32 %s32, 1
        %s264 = scalar_lea.sflag [#allocation3], %s263
        %s265 = sand.u32 %s32, 1
        %s266 = smul.addr %s265, 4
        %s267 = scalar_lea.vmem [#allocation2], %s266
        %p268 = pneg %p45
        %p269 = pneg %p42
        %s270 = sand.u32 %s24, 1
        %s271 = scalar_lea.sflag [#allocation6], %s270
        %s272 = sand.u32 %s58, 1
        %s273 = smul.addr %s272, 4
        %s274 = scalar_lea.vmem [#allocation5], %s273
        %p275 = pneg %p71
        %p276 = pneg %p68
        %s277 = sand.u32 %s24, 1
        %s278 = scalar_lea.sflag [#allocation6], %s277
        %s279 = sand.u32 %s84, 1
        %s280 = smul.addr %s279, 4
        %s281 = scalar_lea.vmem [#allocation7], %s280
        %p282 = pneg %p97
        %p283 = pneg %p94
        %p284 = scmp.lt.s32.totalorder %s24, 1
        %s285 = scalar_select %p284, %s24, 1
        %s286 = smul.addr %s285, 4
        %s287 = scalar_lea.vmem %s3, %s286
        %p288 = pneg %p123
        %p289 = pneg %p120
        %p290 = pneg %p149
        %p291 = pneg %p146
        %s292 = sand.u32 %s136, 1
        %s293 = scalar_lea.sflag [#allocation4], %s292
        %s294 = sand.u32 %s136, 1
        %s295 = smul.addr %s294, 4
        %s296 = scalar_lea.vmem [#allocation8], %s295
        %p297 = scmp.lt.s32.totalorder %s24, 1
        %s298 = scalar_select %p297, %s24, 1
        %s299 = smul.addr %s298, 4
        %s300 = scalar_lea.vmem %s3, %s299
        %v301 = vld [vmem:[%s240] sm:$0xf]
        %v302 = vld [vmem:[%s249] sm:$0xf]
        %v303 = vadd.f32 %v301, %v302
        %v304 = vld [vmem:[%s258] sm:$0xf]
        %v305 = vadd.f32 %v303, %v304
        %v306 = vld [vmem:[%s300] sm:$0xf]
        %v307 = vadd.f32 %v305, %v306
        %v308 = vmul.f32 %v307, 0.25
        %vm309 = vcmask 519168
        %310 = vst.msk [vmem:[%s296] sm:$0xf] %vm309, %v308
        %312 = vrot.lane.b32.xlu0 %v308, 64
        %v313 = vpop.permute.xlu0 %312
        %vm315 = vcmask 1043968
        %316 = vst.msk [vmem:[%s296] sm:$0xf] %vm315, %v313
        %s317 = sand.u32 %s136, 1
        %s318 = scalar_lea.sflag [#allocation4], %s317
        %s319 = sand.u32 %s136, 1
        %s320 = smul.addr %s319, 4
        %s321 = scalar_lea.vmem [#allocation8], %s320
        // Predicated region
        $region49: #{tpu_custom_call.1} parent=35 // pred_check
          %p322 = pneg %p146
        $region50: #{tpu_custom_call.1} parent=35 // pred_check_branch
          %324 = sbr.rel (%p322) target = $region52
        $region51: #{tpu_custom_call.1} parent=35 // pred_region
          %s326 = ssub.s32 64, 64
          %327 = vsyncadd %s318, %s326
          %s328 = smul.addr %s24, 64
          %s329 = scalar_lea.hbm %s4, %s328
          %s331 = sshll.u32 %s321, 4
          %s332 = int_to_ptr.vmem [resolvable:$true] %s331
          %334 = dma.vmem_to_hbm [thread:$0]  %s332, 64, %s329, %s318
        $region52: #{tpu_custom_call.1} parent=35 // pred_fallthru
          _
      $region36: #{tpu_custom_call.1} parent=5 // pred_fallthru
        _
      %p335 = scmp.le.s32.totalorder 2, %s19
      // Predicated region
      $region53: #{tpu_custom_call.1} parent=5 // pred_check
        %p336 = pneg %p335
      $region54: #{tpu_custom_call.1} parent=5 // pred_check_branch
        %338 = sbr.rel (%p336) target = $region56
      $region55: #{tpu_custom_call.1} parent=5 // pred_region
        %s339 = ssub.s32 %s19, 2
        // Predicated region
        $region57: #{tpu_custom_call.1} parent=55 // pred_check
          %p340 = pneg %p152
        $region58: #{tpu_custom_call.1} parent=55 // pred_check_branch
          %342 = sbr.rel (%p340) target = $region60
        $region59: #{tpu_custom_call.1} parent=55 // pred_region
          %s343 = sand.u32 %s137, 1
          %s344 = scalar_lea.sflag [#allocation4], %s343
          %s345 = sand.u32 %s137, 1
          %s346 = smul.addr %s345, 4
          %s347 = scalar_lea.vmem [#allocation8], %s346
          %348 = dma.done %s344, 64
        $region60: #{tpu_custom_call.1} parent=55 // pred_fallthru
          _
      $region56: #{tpu_custom_call.1} parent=5 // pred_fallthru
        _
    $region6: #{tpu_custom_call.1} parent=1 // loop_footer
      %s23 = sadd.s32 1, %s19
    $region7: #{tpu_custom_call.1} parent=1 // loop_footer_branch
      %18 = sbr.rel target = $region3
    $region8: #{tpu_custom_call.1} parent=1 // loop_exit
      _
    %349 = vsyncpa [#allocation3], 1
    %s350 = scalar_lea.sflag [#allocation3], 1
    %351 = vsyncpa %s350, 1
    %352 = vsyncpa [#allocation6], 1
    %s353 = scalar_lea.sflag [#allocation6], 1
    %354 = vsyncpa %s353, 1
    %355 = vsyncpa [#allocation4], 1
    %s356 = scalar_lea.sflag [#allocation4], 1
    %357 = vsyncpa %s356, 1

</llo_original>
